<compile_context>
chip_gen: v7x
topology: tpu7x:2x2x1
jax: 0.10.0
libtpu: 0.0.40
codegen_flags: <defaults>
</compile_context>

<pallas_src>
import jax
import jax.numpy as jnp
from jax.experimental import pallas as pl
from jax.experimental.pallas import tpu as pltpu


def _normalise_kernel(mean_ref, inv_std_ref, x_ref, out_ref):
    # mean_ref / inv_std_ref : SMEM (C,) f32 scalars (scalar-prefetched).
    # x_ref / out_ref        : (TR, LANE) lane-dense tile of one channel.
    c = pl.program_id(1)
    out_ref[...] = ((x_ref[...] - mean_ref[c]) * inv_std_ref[c]).astype(out_ref.dtype)


def _pick_lane_width(n, max_lane=8192):
    """Largest multiple of 128 (<= max_lane) that divides n exactly, or None."""
    start = min(max_lane, (n // 128) * 128)
    for cand in range(start, 0, -128):
        if n % cand == 0:
            return cand
    return None


_TARGET_BLOCK_BYTES = 4 * 1024 * 1024  # 4 MiB x (in+out) x 2 buffers ~= 16 MiB VMEM


def _pick_row_block(rows, lane, elem_bytes):
    """Row-block: multiple of 8 sublanes, ~_TARGET_BLOCK_BYTES payload,
    preferring an exact divisor of `rows` so there is no ragged tail block."""
    if rows <= 8:
        return rows                      # block == full array dim (allowed)
    target = max(8, _TARGET_BLOCK_BYTES // (lane * elem_bytes))
    target = min(target, rows)
    target -= target % 8
    target = max(target, 8)
    for tr in range(target, 7, -8):      # small trace-time search (<= ~16 iters)
        if rows % tr == 0:
            return tr
    return target                        # ragged tail handled by Pallas masking


@jax.jit
def normalise_pallas(img, mean, std):
    """img: (3, N, H, W) float array; mean/std: per-channel stats of shape (3,)."""
    C = img.shape[0]
    dtype = img.dtype
    flat = img.reshape(C, -1)            # (C, L) — free reshape, no HBM copy
    L = flat.shape[1]

    lane = _pick_lane_width(L)
    pad = 0
    if lane is None:
        # Rare fallback for awkward per-channel sizes: minimal pad to a
        # lane-dense width (only this path materialises a padded copy).
        lane = 1024 if L >= 1024 else 128
        pad = (-L) % lane
        flat = jnp.pad(flat, ((0, 0), (0, pad)))
    Lp = L + pad
    rows = Lp // lane
    x3d = flat.reshape(C, rows, lane)    # (C, R, LANE) lane-dense per-channel view

    tr = _pick_row_block(rows, lane, img.dtype.itemsize)
    grid = (pl.cdiv(rows, tr), C)        # big axis leads -> even megacore split

    mean_s = jnp.asarray(mean).reshape(C).astype(jnp.float32)
    inv_std_s = (1.0 / jnp.asarray(std).reshape(C)).astype(jnp.float32)

    # index_map receives (grid indices..., *scalar-prefetch refs).
    block = pl.BlockSpec((None, tr, lane), lambda r, c, m, s: (c, r, 0))

    out3d = pl.pallas_call(
        _normalise_kernel,
        out_shape=jax.ShapeDtypeStruct((C, rows, lane), dtype),
        grid_spec=pltpu.PrefetchScalarGridSpec(
            num_scalar_prefetch=2,
            grid=grid,
            in_specs=[block],
            out_specs=block,
        ),
        compiler_params=pltpu.CompilerParams(
            # Both grid axes independent -> shard across v7x's 2 TensorCores.
            dimension_semantics=("parallel", "parallel"),
            vmem_limit_bytes=32 * 1024 * 1024,
        ),
    )(mean_s, inv_std_s, x3d)

    out_flat = out3d.reshape(C, Lp)
    if pad:
        out_flat = out_flat[:, :L]
    return out_flat.reshape(img.shape)


def normalise_ref(img, mean, std):
    # Pure-JAX reference matching the PyTorch semantics.
    m = jnp.asarray(mean).reshape(3, 1, 1, 1)
    s = jnp.asarray(std).reshape(3, 1, 1, 1)
    return (img - m) / s


if __name__ == "__main__":
    key = jax.random.PRNGKey(0)
    # Channel-first (3, N, H, W), matching the PyTorch mean.reshape(3,1,1,1).
    img = jax.random.uniform(key, (3, 2, 16, 16), dtype=jnp.float32)
    mean = jnp.array([0.485, 0.456, 0.406], dtype=jnp.float32)
    std = jnp.array([0.229, 0.224, 0.225], dtype=jnp.float32)

    out = normalise_pallas(img, mean, std)
    out = jax.block_until_ready(out)

    expected = normalise_ref(img, mean, std)
    assert out.shape == img.shape and out.dtype == jnp.float32
    assert jnp.allclose(out, expected, atol=1e-5, rtol=1e-5)
    print("KERNEL_OK")
</pallas_src>

<mosaic_0001>
module attributes {stable_mosaic.version = 11 : i64} {
  func.func @_normalise_kernel(%arg0: i32, %arg1: i32, %arg2: memref<3xf32, #tpu.memory_space<smem>>, %arg3: memref<3xf32, #tpu.memory_space<smem>>, %arg4: memref<1x1x512xf32, #tpu.memory_space<vmem>>, %arg5: memref<1x1x512xf32, #tpu.memory_space<vmem>>) attributes {dimension_semantics = [#tpu.dimension_semantics<parallel>, #tpu.dimension_semantics<parallel>], iteration_bounds = array<i64: 1, 3>, scalar_prefetch = 2 : i64, scratch_operands = 0 : i64, tpu.core_type = #tpu.core_type<tc>, window_params = [{transform_indices = @transform_0, window_bounds = array<i64: 1, 1, 512>}, {transform_indices = @transform_1, window_bounds = array<i64: 1, 1, 512>}]} {
    %c0 = arith.constant 0 : index
    %c0_0 = arith.constant 0 : index
    %c0_1 = arith.constant 0 : index
    %0 = vector.load %arg4[%c0, %c0_0, %c0_1] : memref<1x1x512xf32, #tpu.memory_space<vmem>>, vector<1x1x512xf32>
    %1 = vector.shape_cast %0 : vector<1x1x512xf32> to vector<1x512xf32>
    %2 = arith.index_cast %arg1 : i32 to index
    %3 = memref.load %arg2[%2] : memref<3xf32, #tpu.memory_space<smem>>
    %4 = vector.broadcast %3 : f32 to vector<1x512xf32>
    %5 = arith.subf %1, %4 : vector<1x512xf32>
    %6 = arith.index_cast %arg1 : i32 to index
    %7 = memref.load %arg3[%6] : memref<3xf32, #tpu.memory_space<smem>>
    %8 = vector.broadcast %7 : f32 to vector<1x512xf32>
    %9 = arith.mulf %5, %8 : vector<1x512xf32>
    %c0_2 = arith.constant 0 : index
    %c0_3 = arith.constant 0 : index
    %c0_4 = arith.constant 0 : index
    %10 = vector.load %arg5[%c0_2, %c0_3, %c0_4] : memref<1x1x512xf32, #tpu.memory_space<vmem>>, vector<1x1x512xf32>
    %11 = vector.shape_cast %10 : vector<1x1x512xf32> to vector<1x512xf32>
    %12 = vector.shape_cast %9 : vector<1x512xf32> to vector<1x1x512xf32>
    tpu.vector_store %arg5[%c0_2, %c0_3, %c0_4], %12 {strides = array<i32>} : memref<1x1x512xf32, #tpu.memory_space<vmem>>, vector<1x1x512xf32>,
    return
  }
  func.func @transform_0(%arg0: i32, %arg1: i32, %arg2: memref<3xf32, #tpu.memory_space<smem>>, %arg3: memref<3xf32, #tpu.memory_space<smem>>) -> (i32, i32, i32) {
    %c0_i32 = arith.constant 0 : i32
    %c0_i32_0 = arith.constant 0 : i32
    return %arg1, %arg0, %c0_i32 : i32, i32, i32
  }
  func.func @transform_1(%arg0: i32, %arg1: i32, %arg2: memref<3xf32, #tpu.memory_space<smem>>, %arg3: memref<3xf32, #tpu.memory_space<smem>>) -> (i32, i32, i32) {
    %c0_i32 = arith.constant 0 : i32
    %c0_i32_0 = arith.constant 0 : i32
    return %arg1, %arg0, %c0_i32 : i32, i32, i32
  }
}

</mosaic_0001>

<llo_original>
// kernel: normalise_pallas.1
$region0: #{normalise_pallas.1}
  #allocation0 [shape = 'u32[]', space=smem, size = 0x4, offset = 0x4, fixed_abs, tag = 'smem constant byte address 0x4 - core index']
  #allocation1 [shape = 'u32[144,128]{1,0:T(1,128)}', space=vmem, size = 0x12000, scoped, tag = 'internal scratch']
  #allocation2 [shape = 's32[1]{0}', space=sflag, size = 0x4, scoped, tag = 'scoped memory for normalise_pallas.1']
  #allocation3 [shape = 'u8[512]{0}', space=smem, size = 0x200, scoped, tag = 'prefetched SMEM operand 0']
  #allocation4 [shape = 'u8[512]{0}', space=smem, size = 0x200, scoped, tag = 'prefetched SMEM operand 1']
  %s0 = inlined_call_operand.vmem [shape: f32[3], index: 0, kind: input, shape index: {}]
  %s1 = inlined_call_operand.vmem [shape: f32[3], index: 1, kind: input, shape index: {}]
  %s2 = inlined_call_operand.vmem [shape: f32[3,1,512], index: 2, kind: input, shape index: {}]
  %s3 = inlined_call_operand.vmem [shape: f32[3,1,512], index: 3, kind: output, shape index: {}]
  %s4 = sld [smem:[#allocation0]]
  $region37: #{normalise_pallas.1} parent=0
    _
  %s6 = ssub.s32 1, %s4
  %s7 = scalar_select 0, %s6, %s4
  %s8 = sshll.u32 %s0, 4
  %s9 = int_to_ptr.vmem [resolvable:$true] %s8
  %11 = dma.vmem_to_smem %s9, 16, [#allocation3], [#allocation2]
  %s12 = sshll.u32 %s1, 4
  %s13 = int_to_ptr.vmem [resolvable:$true] %s12
  %15 = dma.vmem_to_smem %s13, 16, [#allocation4], [#allocation2]
  %16 = dma.done [#allocation2], 32
  %17 = sfence
  loop: start=0, step=1, limit=5
  $region2: #{normalise_pallas.1} parent=0 // loop_pre_header
    _
  $region3: #{normalise_pallas.1} parent=0 // loop_header
    %s19 = sphi 0, %s23
    %p20 = scmp.ge.s32.totalorder %s19, 5
    %s26 = sphi 0, %s38
    %s27 = sphi 0, %s34
    %s28 = sphi 0, %s26
    %s29 = sphi 0, %s27
    %s30 = sphi 0, %s28
    %s31 = sphi 0, %s29
    %s43 = sphi 0, %s45
    %s46 = sphi 0, %s43
    %s47 = sphi 0, %s46
    %s63 = sphi 0, %s47
    %s71 = sphi 0, %s73
    %s74 = sphi 0, %s71
    %s75 = sphi 0, %s74
    %s91 = sphi 0, %s75
  $region4: #{normalise_pallas.1} parent=0 // loop_header_branch
    %22 = sbr.rel (%p20) target = $region8
  $region5: #{normalise_pallas.1} parent=0 // loop_body
    %s24 = ssub.s32 %s19, 1
    %s25 = ssub.s32 %s19, 2
    %s32 = sadd.s32 1, %s27
    %p33 = scmp.ge.s32.totalorder %s32, 3
    %s34 = scalar_select %p33, 0, %s32
    %s35 = sadd.s32 1, %s26
    %s36 = scalar_select %p33, %s35, %s26
    %p37 = scmp.ge.s32.totalorder %s36, 1
    %s38 = scalar_select %p37, 0, %s36
    %s39 = ssub.s32 %s27, %s34
    %s40 = ssub.s32 %s26, %s38
    %s41 = sor.u32 %s39, %s40
    %p42 = scmp.eq.s32.totalorder %s41, 0
    %s44 = sadd.s32 %s43, 1
    %s45 = scalar_select %p42, %s43, %s44
    %p48 = pneg %p42
    %p49 = scmp.eq.s32.totalorder %s19, 2
    %p50 = por %p48, %p49
    %p51 = scmp.ne.s32.totalorder %s43, %s46
    %p52 = scmp.eq.s32.totalorder %s19, 0
    %p53 = por %p51, %p52
    %p54 = scmp.ne.s32.totalorder %s43, %s46
    %p55 = scmp.eq.s32.totalorder %s24, 2
    %p56 = por %p54, %p55
    %p57 = scmp.ne.s32.totalorder %s46, %s47
    %p58 = scmp.eq.s32.totalorder %s24, 0
    %p59 = por %p57, %p58
    %p60 = scmp.ne.s32.totalorder %s46, %s47
    %p61 = scmp.eq.s32.totalorder %s25, 2
    %p62 = por %p60, %p61
    %p64 = scmp.ne.s32.totalorder %s47, %s63
    %p65 = scmp.eq.s32.totalorder %s25, 0
    %p66 = por %p64, %p65
    %s67 = ssub.s32 %s27, %s34
    %s68 = ssub.s32 %s26, %s38
    %s69 = sor.u32 %s67, %s68
    %p70 = scmp.eq.s32.totalorder %s69, 0
    %s72 = sadd.s32 %s71, 1
    %s73 = scalar_select %p70, %s71, %s72
    %p76 = pneg %p70
    %p77 = scmp.eq.s32.totalorder %s19, 2
    %p78 = por %p76, %p77
    %p79 = scmp.ne.s32.totalorder %s71, %s74
    %p80 = scmp.eq.s32.totalorder %s19, 0
    %p81 = por %p79, %p80
    %p82 = scmp.ne.s32.totalorder %s71, %s74
    %p83 = scmp.eq.s32.totalorder %s24, 2
    %p84 = por %p82, %p83
    %p85 = scmp.ne.s32.totalorder %s74, %s75
    %p86 = scmp.eq.s32.totalorder %s24, 0
    %p87 = por %p85, %p86
    %p88 = scmp.ne.s32.totalorder %s74, %s75
    %p89 = scmp.eq.s32.totalorder %s25, 2
    %p90 = por %p88, %p89
    %p92 = scmp.ne.s32.totalorder %s75, %s91
    %p93 = scmp.eq.s32.totalorder %s25, 0
    %p94 = por %p92, %p93
    %p95 = scmp.le.s32.totalorder 1, %s19
    %p96 = scmp.lt.s32.totalorder %s19, 4
    %p97 = pnand %p95, %p96
    %p98 = pneg %p97
    // Predicated region
    $region9: #{normalise_pallas.1} parent=5 // pred_check
      _
    $region10: #{normalise_pallas.1} parent=5 // pred_check_branch
      %100 = sbr.rel (%p97) target = $region12
    $region11: #{normalise_pallas.1} parent=5 // pred_region
      %s101 = ssub.s32 %s19, 1
    $region12: #{normalise_pallas.1} parent=5 // pred_fallthru
      _
    %p102 = scmp.lt.s32.totalorder %s19, 3
    // Predicated region
    $region13: #{normalise_pallas.1} parent=5 // pred_check
      %p103 = pneg %p102
    $region14: #{normalise_pallas.1} parent=5 // pred_check_branch
      %105 = sbr.rel (%p103) target = $region16
    $region15: #{normalise_pallas.1} parent=5 // pred_region
      // Predicated region
      $region17: #{normalise_pallas.1} parent=15 // pred_check
        %p106 = pneg %p53
      $region18: #{normalise_pallas.1} parent=15 // pred_check_branch
        %108 = sbr.rel (%p106) target = $region20
      $region19: #{normalise_pallas.1} parent=15 // pred_region
        %p109 = scmp.lt.s32.totalorder %s27, 2
        %s110 = scalar_select %p109, %s27, 2
        %p111 = scmp.lt.s32.totalorder %s26, 0
        %s112 = scalar_select %p111, %s26, 0
        %s113 = smul.addr %s112, 4
        %s114 = smul.addr %s110, 4
        %s115 = sadd.s32 %s113, %s114
        %s116 = scalar_lea.vmem %s2, %s115
      $region20: #{normalise_pallas.1} parent=15 // pred_fallthru
        _
    $region16: #{normalise_pallas.1} parent=5 // pred_fallthru
      _
    %p117 = scmp.le.s32.totalorder 1, %s19
    %p118 = scmp.lt.s32.totalorder %s19, 4
    %p119 = pnand %p117, %p118
    %p120 = pneg %p119
    // Predicated region
    $region21: #{normalise_pallas.1} parent=5 // pred_check
      _
    $region22: #{normalise_pallas.1} parent=5 // pred_check_branch
      %122 = sbr.rel (%p119) target = $region24
    $region23: #{normalise_pallas.1} parent=5 // pred_region
      %s123 = ssub.s32 %s19, 1
      %p124 = scmp.lt.s32.totalorder %s29, 2
      %s125 = scalar_select %p124, %s29, 2
      %p126 = scmp.lt.s32.totalorder %s28, 0
      %s127 = scalar_select %p126, %s28, 0
      %s128 = smul.addr %s127, 4
      %s129 = smul.addr %s125, 4
      %s130 = sadd.s32 %s128, %s129
      %s131 = scalar_lea.vmem %s2, %s130
      %p132 = pneg %p59
      %p133 = pneg %p56
      %p134 = pneg %p87
      %p135 = pneg %p84
      %p136 = scmp.lt.s32.totalorder %s29, 2
      %s137 = scalar_select %p136, %s29, 2
      %p138 = scmp.lt.s32.totalorder %s28, 0
      %s139 = scalar_select %p138, %s28, 0
      %s140 = smul.addr %s139, 4
      %s141 = smul.addr %s137, 4
      %s142 = sadd.s32 %s140, %s141
      %s143 = scalar_lea.vmem %s3, %s142
      %p144 = scmp.lt.s32.totalorder %s29, 2
      %s145 = scalar_select %p144, %s29, 2
      %p146 = scmp.lt.s32.totalorder %s28, 0
      %s147 = scalar_select %p146, %s28, 0
      %s148 = smul.addr %s147, 4
      %s149 = smul.addr %s145, 4
      %s150 = sadd.s32 %s148, %s149
      %s151 = scalar_lea.vmem %s2, %s150
      %p152 = scmp.lt.s32.totalorder %s29, 2
      %s153 = scalar_select %p152, %s29, 2
      %p154 = scmp.lt.s32.totalorder %s28, 0
      %s155 = scalar_select %p154, %s28, 0
      %s156 = smul.addr %s155, 4
      %s157 = smul.addr %s153, 4
      %s158 = sadd.s32 %s156, %s157
      %s159 = scalar_lea.vmem %s3, %s158
      %v160 = vld [vmem:[%s151] sm:$0xf]
      %s161 = sld [smem:[#allocation3 + %s29]]
      %v162 = vstv %s161
      %v163 = vsub.f32 %v160, %v162
      %s164 = sld [smem:[#allocation4 + %s29]]
      %v165 = vstv %s164
      %v166 = vmul.f32 %v163, %v165
      %v167 = vlaneseq
      %vm168 = vcmp.ge.s32.totalorder %v167, 0
      %vm169 = vcmp.lt.s32.totalorder %v167, 512
      %vm170 = vmand %vm168, %vm169
      %171 = vst.msk [vmem:[%s159] sm:$0xf] %vm170, %v166
      %p172 = scmp.lt.s32.totalorder %s29, 2
      %s173 = scalar_select %p172, %s29, 2
      %p174 = scmp.lt.s32.totalorder %s28, 0
      %s175 = scalar_select %p174, %s28, 0
      %s176 = smul.addr %s175, 4
      %s177 = smul.addr %s173, 4
      %s178 = sadd.s32 %s176, %s177
      %s179 = scalar_lea.vmem %s3, %s178
      // Predicated region
      $region25: #{normalise_pallas.1} parent=23 // pred_check
        %p180 = pneg %p84
      $region26: #{normalise_pallas.1} parent=23 // pred_check_branch
        %182 = sbr.rel (%p180) target = $region28
      $region27: #{normalise_pallas.1} parent=23 // pred_region
        _
      $region28: #{normalise_pallas.1} parent=23 // pred_fallthru
        _
    $region24: #{normalise_pallas.1} parent=5 // pred_fallthru
      _
    %p183 = scmp.le.s32.totalorder 2, %s19
    // Predicated region
    $region29: #{normalise_pallas.1} parent=5 // pred_check
      %p184 = pneg %p183
    $region30: #{normalise_pallas.1} parent=5 // pred_check_branch
      %186 = sbr.rel (%p184) target = $region32
    $region31: #{normalise_pallas.1} parent=5 // pred_region
      %s187 = ssub.s32 %s19, 2
      // Predicated region
      $region33: #{normalise_pallas.1} parent=31 // pred_check
        %p188 = pneg %p90
      $region34: #{normalise_pallas.1} parent=31 // pred_check_branch
        %190 = sbr.rel (%p188) target = $region36
      $region35: #{normalise_pallas.1} parent=31 // pred_region
        %p191 = scmp.lt.s32.totalorder %s31, 2
        %s192 = scalar_select %p191, %s31, 2
        %p193 = scmp.lt.s32.totalorder %s30, 0
        %s194 = scalar_select %p193, %s30, 0
        %s195 = smul.addr %s194, 4
        %s196 = smul.addr %s192, 4
        %s197 = sadd.s32 %s195, %s196
        %s198 = scalar_lea.vmem %s3, %s197
      $region36: #{normalise_pallas.1} parent=31 // pred_fallthru
        _
    $region32: #{normalise_pallas.1} parent=5 // pred_fallthru
      _
  $region6: #{normalise_pallas.1} parent=0 // loop_footer
    %s23 = sadd.s32 1, %s19
  $region7: #{normalise_pallas.1} parent=0 // loop_footer_branch
    %18 = sbr.rel target = $region3
  $region8: #{normalise_pallas.1} parent=0 // loop_exit
    _

</llo_original>
